<compile_context>
chip_gen: v7x
topology: tpu7x:2x2x1
jax: 0.10.0
libtpu: 0.0.40
codegen_flags: <defaults>
</compile_context>

<pallas_src>
import jax
import jax.numpy as jnp
import numpy as np
from jax.experimental import pallas as pl
from jax.experimental.pallas import tpu as pltpu


def _round_up(a, b):
    return (a + b - 1) // b * b


def gru_cell_kernel(xh_ref, x_ref, h_ref,
                    w_r_ref, w_i_ref, wx_n_ref, wh_n_ref,
                    b_r_ref, b_i_ref, b_xn_ref, b_hn_ref,
                    out_ref):
    h = h_ref[...].astype(jnp.float32)          # f32 copy of hidden for the blend
    xh = xh_ref[...]                            # (tb, in+H) bf16

    # Fused r / i gates: one matmul each over K = in + H  (== i_r + h_r, i_i + h_i).
    rg = jnp.dot(xh, w_r_ref[...], preferred_element_type=jnp.float32) + b_r_ref[...]
    ig = jnp.dot(xh, w_i_ref[...], preferred_element_type=jnp.float32) + b_i_ref[...]
    resetgate = jax.nn.sigmoid(rg)
    inputgate = jax.nn.sigmoid(ig)

    # n-gate: i_n and h_n must stay separate (resetgate scales only h_n).
    i_n = jnp.dot(x_ref[...], wx_n_ref[...],
                  preferred_element_type=jnp.float32) + b_xn_ref[...]
    h_n = jnp.dot(h.astype(wh_n_ref.dtype), wh_n_ref[...],
                  preferred_element_type=jnp.float32) + b_hn_ref[...]
    newgate = jnp.tanh(i_n + resetgate * h_n)

    hy = newgate + inputgate * (h - newgate)
    out_ref[...] = hy.astype(out_ref.dtype)


def gru_cell(x, hidden, params):
    """x: (..., input_size), hidden: (B, hidden_size) -> hy: (B, hidden_size)."""
    w_r, w_i, wx_n, wh_n, b_r, b_i, b_xn, b_hn = params
    x2 = x.reshape(-1, x.shape[-1])             # matches x.view(-1, x.size(-1))
    B, H = hidden.shape
    IN = x2.shape[-1]
    mxu_dtype = w_r.dtype

    # MXU operands in bf16; keep an f32 copy of hidden for the blend.
    xh = jnp.concatenate([x2, hidden], axis=-1).astype(mxu_dtype)   # (B, IN+H)
    x_lo = x2.astype(mxu_dtype)
    h_f32 = hidden.astype(jnp.float32)

    # Batch tiling: big, sublane-aligned blocks; grid axis is "parallel".
    if B <= 512:
        block_b = _round_up(B, 8)
        b_pad = block_b
    else:
        block_b = 512
        b_pad = _round_up(B, block_b)
    if b_pad != B:
        pad = ((0, b_pad - B), (0, 0))
        xh = jnp.pad(xh, pad)
        x_lo = jnp.pad(x_lo, pad)
        h_f32 = jnp.pad(h_f32, pad)
    n_blocks = b_pad // block_b

    def row_spec(width):
        return pl.BlockSpec((block_b, width), lambda i: (i, 0))

    def resident_spec(arr):                     # constant index_map: DMA'd once
        return pl.BlockSpec(arr.shape, lambda i: (0, 0))

    out = pl.pallas_call(
        gru_cell_kernel,
        out_shape=jax.ShapeDtypeStruct((b_pad, H), hidden.dtype),
        grid=(n_blocks,),
        in_specs=[
            row_spec(IN + H), row_spec(IN), row_spec(H),
            resident_spec(w_r), resident_spec(w_i),
            resident_spec(wx_n), resident_spec(wh_n),
            resident_spec(b_r), resident_spec(b_i),
            resident_spec(b_xn), resident_spec(b_hn),
        ],
        out_specs=pl.BlockSpec((block_b, H), lambda i: (i, 0)),
        compiler_params=pltpu.CompilerParams(
            dimension_semantics=("parallel",),
            vmem_limit_bytes=32 * 1024 * 1024),
    )(xh, x_lo, h_f32, w_r, w_i, wx_n, wh_n, b_r, b_i, b_xn, b_hn)
    return out[:B]


def init_params(key, input_size, hidden_size, dtype=jnp.float32):
    """Raw PyTorch-layout parameters: x2h.weight (3H,in), h2h.weight (3H,H), biases (3H,)."""
    std = 1.0 / np.sqrt(hidden_size)
    k1, k2, k3, k4 = jax.random.split(key, 4)
    w_x2h = jax.random.uniform(k1, (3 * hidden_size, input_size), dtype, -std, std)
    w_h2h = jax.random.uniform(k2, (3 * hidden_size, hidden_size), dtype, -std, std)
    b_x2h = jax.random.uniform(k3, (3 * hidden_size,), dtype, -std, std)
    b_h2h = jax.random.uniform(k4, (3 * hidden_size,), dtype, -std, std)
    return w_x2h, w_h2h, b_x2h, b_h2h


def pack_params(w_x2h, w_h2h, b_x2h, b_h2h, hidden_size, mxu_dtype=jnp.bfloat16):
    """Repack PyTorch-layout weights into the fused 2-D bf16 layout the kernel uses."""
    H = hidden_size
    wx = w_x2h.reshape(3, H, -1).transpose(0, 2, 1)   # (3, in, H)  for y = x @ W^T
    wh = w_h2h.reshape(3, H, H).transpose(0, 2, 1)    # (3, H,  H)
    bx = b_x2h.reshape(3, H)
    bh = b_h2h.reshape(3, H)
    # Fused r / i weights over K = in + H; n-gate kept separate.
    w_r = jnp.concatenate([wx[0], wh[0]], axis=0).astype(mxu_dtype)   # (in+H, H)
    w_i = jnp.concatenate([wx[1], wh[1]], axis=0).astype(mxu_dtype)   # (in+H, H)
    wx_n = wx[2].astype(mxu_dtype)                                    # (in, H)
    wh_n = wh[2].astype(mxu_dtype)                                    # (H, H)
    # Fold r/i biases host-side; keep the two n-gate biases separate.
    b_r = (bx[0] + bh[0]).reshape(1, H).astype(jnp.float32)
    b_i = (bx[1] + bh[1]).reshape(1, H).astype(jnp.float32)
    b_xn = bx[2].reshape(1, H).astype(jnp.float32)
    b_hn = bh[2].reshape(1, H).astype(jnp.float32)
    return w_r, w_i, wx_n, wh_n, b_r, b_i, b_xn, b_hn


def gru_cell_ref(x, hidden, w_x2h, w_h2h, b_x2h, b_h2h):
    """Pure-JAX f32 reference mirroring the PyTorch forward exactly."""
    x = x.reshape(-1, x.shape[-1])
    gate_x = x @ w_x2h.T + b_x2h
    gate_h = hidden @ w_h2h.T + b_h2h
    H = hidden.shape[1]
    i_r, i_i, i_n = gate_x[:, :H], gate_x[:, H:2 * H], gate_x[:, 2 * H:]
    h_r, h_i, h_n = gate_h[:, :H], gate_h[:, H:2 * H], gate_h[:, 2 * H:]
    resetgate = jax.nn.sigmoid(i_r + h_r)
    inputgate = jax.nn.sigmoid(i_i + h_i)
    newgate = jnp.tanh(i_n + resetgate * h_n)
    return newgate + inputgate * (hidden - newgate)


if __name__ == "__main__":
    input_size, hidden_size, batch = 16, 32, 8

    key = jax.random.PRNGKey(0)
    kx, kh, kp = jax.random.split(key, 3)
    x = jax.random.normal(kx, (batch, input_size), jnp.float32)
    hidden = jax.random.normal(kh, (batch, hidden_size), jnp.float32)

    raw = init_params(kp, input_size, hidden_size)
    params = pack_params(*raw, hidden_size)

    hy = jax.block_until_ready(gru_cell(x, hidden, params))

    hy_ref = gru_cell_ref(x, hidden, *raw)
    # bf16 MXU operands => loosen tolerance vs the f32 reference.
    np.testing.assert_allclose(np.asarray(hy), np.asarray(hy_ref),
                               rtol=2e-2, atol=2e-2)
    assert hy.shape == (batch, hidden_size)
    print("KERNEL_OK")
</pallas_src>

<mosaic_0001>
module attributes {stable_mosaic.version = 11 : i64} {
  func.func @gru_cell_kernel(%arg0: i32, %arg1: memref<8x48xbf16, #tpu.memory_space<vmem>>, %arg2: memref<8x16xbf16, #tpu.memory_space<vmem>>, %arg3: memref<8x32xf32, #tpu.memory_space<vmem>>, %arg4: memref<48x32xbf16, #tpu.memory_space<vmem>>, %arg5: memref<48x32xbf16, #tpu.memory_space<vmem>>, %arg6: memref<16x32xbf16, #tpu.memory_space<vmem>>, %arg7: memref<32x32xbf16, #tpu.memory_space<vmem>>, %arg8: memref<1x32xf32, #tpu.memory_space<vmem>>, %arg9: memref<1x32xf32, #tpu.memory_space<vmem>>, %arg10: memref<1x32xf32, #tpu.memory_space<vmem>>, %arg11: memref<1x32xf32, #tpu.memory_space<vmem>>, %arg12: memref<8x32xf32, #tpu.memory_space<vmem>>) attributes {dimension_semantics = [#tpu.dimension_semantics<parallel>], iteration_bounds = array<i64: 1>, scalar_prefetch = 0 : i64, scratch_operands = 0 : i64, tpu.core_type = #tpu.core_type<tc>, window_params = [{transform_indices = @transform_0, window_bounds = array<i64: 8, 48>}, {transform_indices = @transform_1, window_bounds = array<i64: 8, 16>}, {transform_indices = @transform_2, window_bounds = array<i64: 8, 32>}, {pipeline_mode = #tpu.pipeline_mode<synchronous>, transform_indices = @transform_3, window_bounds = array<i64: 48, 32>}, {pipeline_mode = #tpu.pipeline_mode<synchronous>, transform_indices = @transform_4, window_bounds = array<i64: 48, 32>}, {pipeline_mode = #tpu.pipeline_mode<synchronous>, transform_indices = @transform_5, window_bounds = array<i64: 16, 32>}, {pipeline_mode = #tpu.pipeline_mode<synchronous>, transform_indices = @transform_6, window_bounds = array<i64: 32, 32>}, {pipeline_mode = #tpu.pipeline_mode<synchronous>, transform_indices = @transform_7, window_bounds = array<i64: 1, 32>}, {pipeline_mode = #tpu.pipeline_mode<synchronous>, transform_indices = @transform_8, window_bounds = array<i64: 1, 32>}, {pipeline_mode = #tpu.pipeline_mode<synchronous>, transform_indices = @transform_9, window_bounds = array<i64: 1, 32>}, {pipeline_mode = #tpu.pipeline_mode<synchronous>, transform_indices = @transform_10, window_bounds = array<i64: 1, 32>}, {transform_indices = @transform_11, window_bounds = array<i64: 8, 32>}]} {
    %c0 = arith.constant 0 : index
    %c0_0 = arith.constant 0 : index
    %0 = vector.load %arg3[%c0, %c0_0] : memref<8x32xf32, #tpu.memory_space<vmem>>, vector<8x32xf32>
    %c0_1 = arith.constant 0 : index
    %c0_2 = arith.constant 0 : index
    %1 = vector.load %arg1[%c0_1, %c0_2] : memref<8x48xbf16, #tpu.memory_space<vmem>>, vector<8x48xbf16>
    %c0_3 = arith.constant 0 : index
    %c0_4 = arith.constant 0 : index
    %2 = vector.load %arg4[%c0_3, %c0_4] : memref<48x32xbf16, #tpu.memory_space<vmem>>, vector<48x32xbf16>
    %cst = arith.constant dense<0.000000e+00> : vector<8x32xf32>
    %3 = tpu.matmul %1, %2, %cst {dimension_numbers = #tpu.dot_dimension_numbers<[1], [0], [0], [1], [0, 0, 1, 1], [], []>} : vector<8x48xbf16>, vector<48x32xbf16>, vector<8x32xf32> -> vector<8x32xf32>
    %c0_5 = arith.constant 0 : index
    %c0_6 = arith.constant 0 : index
    %4 = vector.load %arg8[%c0_5, %c0_6] : memref<1x32xf32, #tpu.memory_space<vmem>>, vector<1x32xf32>
    %5 = vector.broadcast %4 : vector<1x32xf32> to vector<8x32xf32>
    %6 = arith.addf %3, %5 : vector<8x32xf32>
    %c0_7 = arith.constant 0 : index
    %c0_8 = arith.constant 0 : index
    %7 = vector.load %arg5[%c0_7, %c0_8] : memref<48x32xbf16, #tpu.memory_space<vmem>>, vector<48x32xbf16>
    %cst_9 = arith.constant dense<0.000000e+00> : vector<8x32xf32>
    %8 = tpu.matmul %1, %7, %cst_9 {dimension_numbers = #tpu.dot_dimension_numbers<[1], [0], [0], [1], [0, 0, 1, 1], [], []>} : vector<8x48xbf16>, vector<48x32xbf16>, vector<8x32xf32> -> vector<8x32xf32>
    %c0_10 = arith.constant 0 : index
    %c0_11 = arith.constant 0 : index
    %9 = vector.load %arg9[%c0_10, %c0_11] : memref<1x32xf32, #tpu.memory_space<vmem>>, vector<1x32xf32>
    %10 = vector.broadcast %9 : vector<1x32xf32> to vector<8x32xf32>
    %11 = arith.addf %8, %10 : vector<8x32xf32>
    %12 = arith.negf %6 : vector<8x32xf32>
    %13 = math.exp %12 : vector<8x32xf32>
    %cst_12 = arith.constant 1.000000e+00 : f32
    %14 = vector.broadcast %cst_12 : f32 to vector<8x32xf32>
    %15 = arith.addf %14, %13 : vector<8x32xf32>
    %16 = arith.divf %14, %15 : vector<8x32xf32>
    %17 = arith.negf %11 : vector<8x32xf32>
    %18 = math.exp %17 : vector<8x32xf32>
    %cst_13 = arith.constant 1.000000e+00 : f32
    %19 = vector.broadcast %cst_13 : f32 to vector<8x32xf32>
    %20 = arith.addf %19, %18 : vector<8x32xf32>
    %21 = arith.divf %19, %20 : vector<8x32xf32>
    %c0_14 = arith.constant 0 : index
    %c0_15 = arith.constant 0 : index
    %22 = vector.load %arg2[%c0_14, %c0_15] : memref<8x16xbf16, #tpu.memory_space<vmem>>, vector<8x16xbf16>
    %c0_16 = arith.constant 0 : index
    %c0_17 = arith.constant 0 : index
    %23 = vector.load %arg6[%c0_16, %c0_17] : memref<16x32xbf16, #tpu.memory_space<vmem>>, vector<16x32xbf16>
    %cst_18 = arith.constant dense<0.000000e+00> : vector<8x32xf32>
    %24 = tpu.matmul %22, %23, %cst_18 {dimension_numbers = #tpu.dot_dimension_numbers<[1], [0], [0], [1], [0, 0, 1, 1], [], []>} : vector<8x16xbf16>, vector<16x32xbf16>, vector<8x32xf32> -> vector<8x32xf32>
    %c0_19 = arith.constant 0 : index
    %c0_20 = arith.constant 0 : index
    %25 = vector.load %arg10[%c0_19, %c0_20] : memref<1x32xf32, #tpu.memory_space<vmem>>, vector<1x32xf32>
    %26 = vector.broadcast %25 : vector<1x32xf32> to vector<8x32xf32>
    %27 = arith.addf %24, %26 : vector<8x32xf32>
    %28 = arith.truncf %0 : vector<8x32xf32> to vector<8x32xbf16>
    %c0_21 = arith.constant 0 : index
    %c0_22 = arith.constant 0 : index
    %29 = vector.load %arg7[%c0_21, %c0_22] : memref<32x32xbf16, #tpu.memory_space<vmem>>, vector<32x32xbf16>
    %cst_23 = arith.constant dense<0.000000e+00> : vector<8x32xf32>
    %30 = tpu.matmul %28, %29, %cst_23 {dimension_numbers = #tpu.dot_dimension_numbers<[1], [0], [0], [1], [0, 0, 1, 1], [], []>} : vector<8x32xbf16>, vector<32x32xbf16>, vector<8x32xf32> -> vector<8x32xf32>
    %c0_24 = arith.constant 0 : index
    %c0_25 = arith.constant 0 : index
    %31 = vector.load %arg11[%c0_24, %c0_25] : memref<1x32xf32, #tpu.memory_space<vmem>>, vector<1x32xf32>
    %32 = vector.broadcast %31 : vector<1x32xf32> to vector<8x32xf32>
    %33 = arith.addf %30, %32 : vector<8x32xf32>
    %34 = arith.mulf %16, %33 : vector<8x32xf32>
    %35 = arith.addf %27, %34 : vector<8x32xf32>
    %36 = math.tanh %35 : vector<8x32xf32>
    %37 = arith.subf %0, %36 : vector<8x32xf32>
    %38 = arith.mulf %21, %37 : vector<8x32xf32>
    %39 = arith.addf %36, %38 : vector<8x32xf32>
    %c0_26 = arith.constant 0 : index
    %c0_27 = arith.constant 0 : index
    %40 = vector.load %arg12[%c0_26, %c0_27] : memref<8x32xf32, #tpu.memory_space<vmem>>, vector<8x32xf32>
    tpu.vector_store %arg12[%c0_26, %c0_27], %39 {strides = array<i32>} : memref<8x32xf32, #tpu.memory_space<vmem>>, vector<8x32xf32>,
    return
  }
  func.func @transform_0(%arg0: i32) -> (i32, i32) {
    %c0_i32 = arith.constant 0 : i32
    %c0_i32_0 = arith.constant 0 : i32
    return %arg0, %c0_i32 : i32, i32
  }
  func.func @transform_1(%arg0: i32) -> (i32, i32) {
    %c0_i32 = arith.constant 0 : i32
    %c0_i32_0 = arith.constant 0 : i32
    return %arg0, %c0_i32 : i32, i32
  }
  func.func @transform_2(%arg0: i32) -> (i32, i32) {
    %c0_i32 = arith.constant 0 : i32
    %c0_i32_0 = arith.constant 0 : i32
    return %arg0, %c0_i32 : i32, i32
  }
  func.func @transform_3(%arg0: i32) -> (i32, i32) {
    %c0_i32 = arith.constant 0 : i32
    %c0_i32_0 = arith.constant 0 : i32
    %c0_i32_1 = arith.constant 0 : i32
    return %c0_i32, %c0_i32_0 : i32, i32
  }
  func.func @transform_4(%arg0: i32) -> (i32, i32) {
    %c0_i32 = arith.constant 0 : i32
    %c0_i32_0 = arith.constant 0 : i32
    %c0_i32_1 = arith.constant 0 : i32
    return %c0_i32, %c0_i32_0 : i32, i32
  }
  func.func @transform_5(%arg0: i32) -> (i32, i32) {
    %c0_i32 = arith.constant 0 : i32
    %c0_i32_0 = arith.constant 0 : i32
    %c0_i32_1 = arith.constant 0 : i32
    return %c0_i32, %c0_i32_0 : i32, i32
  }
  func.func @transform_6(%arg0: i32) -> (i32, i32) {
    %c0_i32 = arith.constant 0 : i32
    %c0_i32_0 = arith.constant 0 : i32
    %c0_i32_1 = arith.constant 0 : i32
    return %c0_i32, %c0_i32_0 : i32, i32
  }
  func.func @transform_7(%arg0: i32) -> (i32, i32) {
    %c0_i32 = arith.constant 0 : i32
    %c0_i32_0 = arith.constant 0 : i32
    %c0_i32_1 = arith.constant 0 : i32
    return %c0_i32, %c0_i32_0 : i32, i32
  }
  func.func @transform_8(%arg0: i32) -> (i32, i32) {
    %c0_i32 = arith.constant 0 : i32
    %c0_i32_0 = arith.constant 0 : i32
    %c0_i32_1 = arith.constant 0 : i32
    return %c0_i32, %c0_i32_0 : i32, i32
  }
  func.func @transform_9(%arg0: i32) -> (i32, i32) {
    %c0_i32 = arith.constant 0 : i32
    %c0_i32_0 = arith.constant 0 : i32
    %c0_i32_1 = arith.constant 0 : i32
    return %c0_i32, %c0_i32_0 : i32, i32
  }
  func.func @transform_10(%arg0: i32) -> (i32, i32) {
    %c0_i32 = arith.constant 0 : i32
    %c0_i32_0 = arith.constant 0 : i32
    %c0_i32_1 = arith.constant 0 : i32
    return %c0_i32, %c0_i32_0 : i32, i32
  }
  func.func @transform_11(%arg0: i32) -> (i32, i32) {
    %c0_i32 = arith.constant 0 : i32
    %c0_i32_0 = arith.constant 0 : i32
    return %arg0, %c0_i32 : i32, i32
  }
}

</mosaic_0001>

<llo_original>
// kernel: tpu_custom_call.1
$region0: #{tpu_custom_call.1}
  #allocation0 [shape = 'u32[]', space=smem, size = 0x4, offset = 0x4, fixed_abs, tag = 'smem constant byte address 0x4 - core index']
  #allocation1 [shape = 'u32[144,128]{1,0:T(1,128)}', space=vmem, size = 0x12000, scoped, tag = 'internal scratch']
  %s0 = inlined_call_operand.vmem [shape: bf16[8,48], index: 0, kind: input, shape index: {}]
  %s1 = inlined_call_operand.vmem [shape: bf16[8,16], index: 1, kind: input, shape index: {}]
  %s2 = inlined_call_operand.vmem [shape: f32[8,32], index: 2, kind: input, shape index: {}]
  %s3 = inlined_call_operand.vmem [shape: bf16[48,32], index: 3, kind: input, shape index: {}]
  %s4 = inlined_call_operand.vmem [shape: bf16[48,32], index: 4, kind: input, shape index: {}]
  %s5 = inlined_call_operand.vmem [shape: bf16[16,32], index: 5, kind: input, shape index: {}]
  %s6 = inlined_call_operand.vmem [shape: bf16[32,32], index: 6, kind: input, shape index: {}]
  %s7 = inlined_call_operand.vmem [shape: f32[1,32], index: 7, kind: input, shape index: {}]
  %s8 = inlined_call_operand.vmem [shape: f32[1,32], index: 8, kind: input, shape index: {}]
  %s9 = inlined_call_operand.vmem [shape: f32[1,32], index: 9, kind: input, shape index: {}]
  %s10 = inlined_call_operand.vmem [shape: f32[1,32], index: 10, kind: input, shape index: {}]
  %s11 = inlined_call_operand.hbm [shape: f32[8,32], index: 11, kind: output, shape index: {}]
  %s12 = sld [smem:[#allocation0]]
  $region54: #{tpu_custom_call.1} parent=0
    _
  %s14 = ssub.s32 1, %s12
  %s15 = scalar_select 0, %s14, %s12
  $region1: #{tpu_custom_call.1} parent=0
    #allocation2 [shape = 'u8[4096]{0}', space=vmem, size = 0x1000, scoped, tag = 'output window, operand 0, single buffered']
    #allocation3 [shape = 's32[1]{0}', space=sflag, size = 0x4, scoped, tag = 'scoped memory for tpu_custom_call.1']
    %16 = vsyncpa [#allocation3], 0
    // Predicated region
    $region2: #{tpu_custom_call.1} parent=1 // pred_check
      _
    $region3: #{tpu_custom_call.1} parent=1 // pred_check_branch
      %18 = sbr.rel (0) target = $region5
    $region4: #{tpu_custom_call.1} parent=1 // pred_region
      _
    $region5: #{tpu_custom_call.1} parent=1 // pred_fallthru
      _
    // Predicated region
    $region6: #{tpu_custom_call.1} parent=1 // pred_check
      _
    $region7: #{tpu_custom_call.1} parent=1 // pred_check_branch
      %20 = sbr.rel (0) target = $region9
    $region8: #{tpu_custom_call.1} parent=1 // pred_region
      _
    $region9: #{tpu_custom_call.1} parent=1 // pred_fallthru
      _
    // Predicated region
    $region10: #{tpu_custom_call.1} parent=1 // pred_check
      _
    $region11: #{tpu_custom_call.1} parent=1 // pred_check_branch
      %22 = sbr.rel (0) target = $region13
    $region12: #{tpu_custom_call.1} parent=1 // pred_region
      _
    $region13: #{tpu_custom_call.1} parent=1 // pred_fallthru
      _
    // Predicated region
    $region14: #{tpu_custom_call.1} parent=1 // pred_check
      _
    $region15: #{tpu_custom_call.1} parent=1 // pred_check_branch
      %24 = sbr.rel (0) target = $region17
    $region16: #{tpu_custom_call.1} parent=1 // pred_region
      _
    $region17: #{tpu_custom_call.1} parent=1 // pred_fallthru
      _
    // Predicated region
    $region18: #{tpu_custom_call.1} parent=1 // pred_check
      _
    $region19: #{tpu_custom_call.1} parent=1 // pred_check_branch
      %26 = sbr.rel (0) target = $region21
    $region20: #{tpu_custom_call.1} parent=1 // pred_region
      _
    $region21: #{tpu_custom_call.1} parent=1 // pred_fallthru
      _
    // Predicated region
    $region22: #{tpu_custom_call.1} parent=1 // pred_check
      _
    $region23: #{tpu_custom_call.1} parent=1 // pred_check_branch
      %28 = sbr.rel (0) target = $region25
    $region24: #{tpu_custom_call.1} parent=1 // pred_region
      _
    $region25: #{tpu_custom_call.1} parent=1 // pred_fallthru
      _
    // Predicated region
    $region26: #{tpu_custom_call.1} parent=1 // pred_check
      _
    $region27: #{tpu_custom_call.1} parent=1 // pred_check_branch
      %30 = sbr.rel (0) target = $region29
    $region28: #{tpu_custom_call.1} parent=1 // pred_region
      _
    $region29: #{tpu_custom_call.1} parent=1 // pred_fallthru
      _
    // Predicated region
    $region30: #{tpu_custom_call.1} parent=1 // pred_check
      _
    $region31: #{tpu_custom_call.1} parent=1 // pred_check_branch
      %32 = sbr.rel (0) target = $region33
    $region32: #{tpu_custom_call.1} parent=1 // pred_region
      _
    $region33: #{tpu_custom_call.1} parent=1 // pred_fallthru
      _
    // Predicated region
    $region34: #{tpu_custom_call.1} parent=1 // pred_check
      _
    $region35: #{tpu_custom_call.1} parent=1 // pred_check_branch
      %34 = sbr.rel (0) target = $region37
    $region36: #{tpu_custom_call.1} parent=1 // pred_region
      _
    $region37: #{tpu_custom_call.1} parent=1 // pred_fallthru
      _
    // Predicated region
    $region38: #{tpu_custom_call.1} parent=1 // pred_check
      _
    $region39: #{tpu_custom_call.1} parent=1 // pred_check_branch
      %36 = sbr.rel (0) target = $region41
    $region40: #{tpu_custom_call.1} parent=1 // pred_region
      _
    $region41: #{tpu_custom_call.1} parent=1 // pred_fallthru
      _
    // Predicated region
    $region42: #{tpu_custom_call.1} parent=1 // pred_check
      _
    $region43: #{tpu_custom_call.1} parent=1 // pred_check_branch
      %38 = sbr.rel (0) target = $region45
    $region44: #{tpu_custom_call.1} parent=1 // pred_region
      _
    $region45: #{tpu_custom_call.1} parent=1 // pred_fallthru
      _
    %v40 = vld [vmem:[%s2] sm:$0xff]
    %v41 = vld [vmem:[%s0] sm:$0xf]
    %v42 = vld [vmem:[%s3] sm:$0xf]
    %v43 = vld [vmem:[%s3 + $0x4] sm:$0xf]
    %v44 = vld [vmem:[%s3 + $0x8] sm:$0xf]
    %v45 = vld [vmem:[%s3 + $0xc] sm:$0xf]
    %v46 = vld [vmem:[%s3 + $0x10] sm:$0xf]
    %v47 = vld [vmem:[%s3 + $0x14] sm:$0xf]
    %v48 = vld [vmem:[%s7] sm:$0x1]
    %v50 = vlaneseq
    %v51 = vshrl.u32 %v50, 7
    %v52 = vsub.s32 0, %v51
    %v53 = vrot.slane %v48, %v52
    %v61 = vunpack.c.l.b16 %v42
    %v62 = vunpack.c.l.b16 %v43
    %v63 = vunpack.c.l.b16 %v44
    %v64 = vunpack.c.l.b16 %v45
    %v65 = vunpack.c.l.b16 %v46
    %v66 = vunpack.c.l.b16 %v47
    %v67 = vpack.c.b16 %v62, %v61
    %v68 = vpack.c.b16 %v64, %v63
    %v69 = vpack.c.b16 %v66, %v65
    %vm73 = vcmask 392192
    %v75 = vsel %vm73, %v41, 0
    %77 = vmatprep.subr.bf16.mxu0 0
    %78 = vmatpush1.bf16.msra.mxu0 %v67
    %79 = vmatprep.subr.bf16.mxu0 0
    %80 = vmatpush1.bf16.msra.mxu0 %v68
    %81 = vmatprep.subr.bf16.mxu0 0
    %82 = vmatpush1.bf16.msra.mxu0 %v69
    %83 = vmatprep.subr.bf16.mxu0 0
    %84 = vmatpush1.bf16.msra.mxu0 0
    %85 = vmatprep.subr.bf16.mxu0 0
    %86 = vmatpush1.bf16.msra.mxu0 0
    %87 = vmatprep.subr.bf16.mxu0 0
    %88 = vmatpush1.bf16.msra.mxu0 0
    %89 = vmatprep.subr.bf16.mxu0 0
    %90 = vmatpush1.bf16.msra.mxu0 0
    %91 = vmatprep.subr.bf16.mxu0 0
    %92 = vmatpush1.bf16.msra.mxu0 0
    %93 = vmatprep.subr.bf16.mxu0 0
    %94 = vmatpush1.bf16.msra.mxu0 0
    %95 = vmatprep.subr.bf16.mxu0 0
    %96 = vmatpush1.bf16.msra.mxu0 0
    %97 = vmatprep.subr.bf16.mxu0 0
    %98 = vmatpush1.bf16.msra.mxu0 0
    %99 = vmatprep.subr.bf16.mxu0 0
    %100 = vmatpush1.bf16.msra.mxu0 0
    %101 = vmatprep.subr.bf16.mxu0 0
    %102 = vmatpush1.bf16.msra.mxu0 0
    %103 = vmatprep.subr.bf16.mxu0 0
    %104 = vmatpush1.bf16.msra.mxu0 0
    %105 = vmatprep.subr.bf16.mxu0 0
    %106 = vmatpush1.bf16.msra.mxu0 0
    %107 = vmatprep.subr.bf16.mxu0 0
    %108 = vmatpush1.bf16.msra.mxu0 0
    %109 = vmatprep.mubr.bf16.mxu0 0
    %110 = vmatmul.mubr.bf16.gmra.mrb[0].mxu0 %v75
    %v111 = vpop.f32.mrb[0].mxu0
    %v112 = vadd.f32 %v53, %v111
    %v113 = vpop.f32.mrb[0].mxu0
    %v114 = vpop.f32.mrb[0].mxu0
    %v115 = vpop.f32.mrb[0].mxu0
    %116 = vdwg.mxu0
    %v117 = vld [vmem:[%s4] sm:$0xf]
    %v118 = vld [vmem:[%s4 + $0x4] sm:$0xf]
    %v119 = vld [vmem:[%s4 + $0x8] sm:$0xf]
    %v120 = vld [vmem:[%s4 + $0xc] sm:$0xf]
    %v121 = vld [vmem:[%s4 + $0x10] sm:$0xf]
    %v122 = vld [vmem:[%s4 + $0x14] sm:$0xf]
    %v123 = vld [vmem:[%s8] sm:$0x1]
    %v125 = vlaneseq
    %v126 = vshrl.u32 %v125, 7
    %v127 = vsub.s32 0, %v126
    %v128 = vrot.slane %v123, %v127
    %v136 = vunpack.c.l.b16 %v117
    %v137 = vunpack.c.l.b16 %v118
    %v138 = vunpack.c.l.b16 %v119
    %v139 = vunpack.c.l.b16 %v120
    %v140 = vunpack.c.l.b16 %v121
    %v141 = vunpack.c.l.b16 %v122
    %v142 = vpack.c.b16 %v137, %v136
    %v143 = vpack.c.b16 %v139, %v138
    %v144 = vpack.c.b16 %v141, %v140
    %148 = vmatprep.subr.bf16.mxu0 0
    %149 = vmatpush1.bf16.msra.mxu0 %v142
    %150 = vmatprep.subr.bf16.mxu0 0
    %151 = vmatpush1.bf16.msra.mxu0 %v143
    %152 = vmatprep.subr.bf16.mxu0 0
    %153 = vmatpush1.bf16.msra.mxu0 %v144
    %154 = vmatprep.subr.bf16.mxu0 0
    %155 = vmatpush1.bf16.msra.mxu0 0
    %156 = vmatprep.subr.bf16.mxu0 0
    %157 = vmatpush1.bf16.msra.mxu0 0
    %158 = vmatprep.subr.bf16.mxu0 0
    %159 = vmatpush1.bf16.msra.mxu0 0
    %160 = vmatprep.subr.bf16.mxu0 0
    %161 = vmatpush1.bf16.msra.mxu0 0
    %162 = vmatprep.subr.bf16.mxu0 0
    %163 = vmatpush1.bf16.msra.mxu0 0
    %164 = vmatprep.subr.bf16.mxu0 0
    %165 = vmatpush1.bf16.msra.mxu0 0
    %166 = vmatprep.subr.bf16.mxu0 0
    %167 = vmatpush1.bf16.msra.mxu0 0
    %168 = vmatprep.subr.bf16.mxu0 0
    %169 = vmatpush1.bf16.msra.mxu0 0
    %170 = vmatprep.subr.bf16.mxu0 0
    %171 = vmatpush1.bf16.msra.mxu0 0
    %172 = vmatprep.subr.bf16.mxu0 0
    %173 = vmatpush1.bf16.msra.mxu0 0
    %174 = vmatprep.subr.bf16.mxu0 0
    %175 = vmatpush1.bf16.msra.mxu0 0
    %176 = vmatprep.subr.bf16.mxu0 0
    %177 = vmatpush1.bf16.msra.mxu0 0
    %178 = vmatprep.subr.bf16.mxu0 0
    %179 = vmatpush1.bf16.msra.mxu0 0
    %180 = vmatprep.mubr.bf16.mxu0 0
    %181 = vmatmul.mubr.bf16.gmra.mrb[0].mxu0 %v75
    %v182 = vpop.f32.mrb[0].mxu0
    %v183 = vadd.f32 %v128, %v182
    %v184 = vpop.f32.mrb[0].mxu0
    %v185 = vpop.f32.mrb[0].mxu0
    %v186 = vpop.f32.mrb[0].mxu0
    %187 = vdwg.mxu0
    %v188 = vxor.u32 %v112, 2147483648
    %v189 = vmul.f32 %v188, 1.442695
    %v190 = vpow.pop %v189
    %v191 = vadd.f32 %v190, 1.0
    %v192 = vrcp.pop %v191
    %v193 = vmul.f32 1.0, %v192
    %v194 = vxor.u32 %v183, 2147483648
    %v195 = vmul.f32 %v194, 1.442695
    %v196 = vpow.pop %v195
    %v197 = vadd.f32 %v196, 1.0
    %v198 = vrcp.pop %v197
    %v199 = vmul.f32 1.0, %v198
    %v200 = vld [vmem:[%s1] sm:$0xf]
    %v201 = vld [vmem:[%s5] sm:$0xf]
    %v202 = vld [vmem:[%s5 + $0x4] sm:$0xf]
    %v203 = vld [vmem:[%s9] sm:$0x1]
    %v205 = vlaneseq
    %v206 = vshrl.u32 %v205, 7
    %v207 = vsub.s32 0, %v206
    %v208 = vrot.slane %v203, %v207
    %v212 = vunpack.c.l.b16 %v201
    %v213 = vunpack.c.l.b16 %v202
    %v214 = vpack.c.b16 %v213, %v212
    %vm216 = vcmask 130048
    %v218 = vsel %vm216, %v200, 0
    %220 = vmatprep.subr.bf16.mxu0 0
    %221 = vmatpush1.bf16.msra.mxu0 %v214
    %222 = vmatprep.subr.bf16.mxu0 0
    %223 = vmatpush1.bf16.msra.mxu0 0
    %224 = vmatprep.subr.bf16.mxu0 0
    %225 = vmatpush1.bf16.msra.mxu0 0
    %226 = vmatprep.subr.bf16.mxu0 0
    %227 = vmatpush1.bf16.msra.mxu0 0
    %228 = vmatprep.subr.bf16.mxu0 0
    %229 = vmatpush1.bf16.msra.mxu0 0
    %230 = vmatprep.subr.bf16.mxu0 0
    %231 = vmatpush1.bf16.msra.mxu0 0
    %232 = vmatprep.subr.bf16.mxu0 0
    %233 = vmatpush1.bf16.msra.mxu0 0
    %234 = vmatprep.subr.bf16.mxu0 0
    %235 = vmatpush1.bf16.msra.mxu0 0
    %236 = vmatprep.subr.bf16.mxu0 0
    %237 = vmatpush1.bf16.msra.mxu0 0
    %238 = vmatprep.subr.bf16.mxu0 0
    %239 = vmatpush1.bf16.msra.mxu0 0
    %240 = vmatprep.subr.bf16.mxu0 0
    %241 = vmatpush1.bf16.msra.mxu0 0
    %242 = vmatprep.subr.bf16.mxu0 0
    %243 = vmatpush1.bf16.msra.mxu0 0
    %244 = vmatprep.subr.bf16.mxu0 0
    %245 = vmatpush1.bf16.msra.mxu0 0
    %246 = vmatprep.subr.bf16.mxu0 0
    %247 = vmatpush1.bf16.msra.mxu0 0
    %248 = vmatprep.subr.bf16.mxu0 0
    %249 = vmatpush1.bf16.msra.mxu0 0
    %250 = vmatprep.subr.bf16.mxu0 0
    %251 = vmatpush1.bf16.msra.mxu0 0
    %252 = vmatprep.mubr.bf16.mxu0 0
    %253 = vmatmul.mubr.bf16.gmra.mrb[0].mxu0 %v218
    %v254 = vpop.f32.mrb[0].mxu0
    %v255 = vadd.f32 %v208, %v254
    %v256 = vpop.f32.mrb[0].mxu0
    %v257 = vpop.f32.mrb[0].mxu0
    %v258 = vpop.f32.mrb[0].mxu0
    %259 = vdwg.mxu0
    %v260 = vpack.c.bf16 %v40, %v40
    %v261 = vld [vmem:[%s6] sm:$0xf]
    %v262 = vld [vmem:[%s6 + $0x4] sm:$0xf]
    %v263 = vld [vmem:[%s6 + $0x8] sm:$0xf]
    %v264 = vld [vmem:[%s6 + $0xc] sm:$0xf]
    %v265 = vld [vmem:[%s10] sm:$0x1]
    %v267 = vlaneseq
    %v268 = vshrl.u32 %v267, 7
    %v269 = vsub.s32 0, %v268
    %v270 = vrot.slane %v265, %v269
    %v276 = vunpack.c.l.b16 %v261
    %v277 = vunpack.c.l.b16 %v262
    %v278 = vunpack.c.l.b16 %v263
    %v279 = vunpack.c.l.b16 %v264
    %v280 = vpack.c.b16 %v277, %v276
    %v281 = vpack.c.b16 %v279, %v278
    %vm284 = vcmask 261120
    %v286 = vsel %vm284, %v260, 0
    %288 = vmatprep.subr.bf16.mxu0 0
    %289 = vmatpush1.bf16.msra.mxu0 %v280
    %290 = vmatprep.subr.bf16.mxu0 0
    %291 = vmatpush1.bf16.msra.mxu0 %v281
    %292 = vmatprep.subr.bf16.mxu0 0
    %293 = vmatpush1.bf16.msra.mxu0 0
    %294 = vmatprep.subr.bf16.mxu0 0
    %295 = vmatpush1.bf16.msra.mxu0 0
    %296 = vmatprep.subr.bf16.mxu0 0
    %297 = vmatpush1.bf16.msra.mxu0 0
    %298 = vmatprep.subr.bf16.mxu0 0
    %299 = vmatpush1.bf16.msra.mxu0 0
    %300 = vmatprep.subr.bf16.mxu0 0
    %301 = vmatpush1.bf16.msra.mxu0 0
    %302 = vmatprep.subr.bf16.mxu0 0
    %303 = vmatpush1.bf16.msra.mxu0 0
    %304 = vmatprep.subr.bf16.mxu0 0
    %305 = vmatpush1.bf16.msra.mxu0 0
    %306 = vmatprep.subr.bf16.mxu0 0
    %307 = vmatpush1.bf16.msra.mxu0 0
    %308 = vmatprep.subr.bf16.mxu0 0
    %309 = vmatpush1.bf16.msra.mxu0 0
    %310 = vmatprep.subr.bf16.mxu0 0
    %311 = vmatpush1.bf16.msra.mxu0 0
    %312 = vmatprep.subr.bf16.mxu0 0
    %313 = vmatpush1.bf16.msra.mxu0 0
    %314 = vmatprep.subr.bf16.mxu0 0
    %315 = vmatpush1.bf16.msra.mxu0 0
    %316 = vmatprep.subr.bf16.mxu0 0
    %317 = vmatpush1.bf16.msra.mxu0 0
    %318 = vmatprep.subr.bf16.mxu0 0
    %319 = vmatpush1.bf16.msra.mxu0 0
    %320 = vmatprep.mubr.bf16.mxu0 0
    %321 = vmatmul.mubr.bf16.gmra.mrb[0].mxu0 %v286
    %v322 = vpop.f32.mrb[0].mxu0
    %v323 = vadd.f32 %v270, %v322
    %v324 = vpop.f32.mrb[0].mxu0
    %v325 = vpop.f32.mrb[0].mxu0
    %v326 = vpop.f32.mrb[0].mxu0
    %327 = vdwg.mxu0
    %v328 = vmul.f32 %v193, %v323
    %v329 = vadd.f32 %v255, %v328
    %v330 = vtanh.pop %v329
    %v331 = vsub.f32 %v40, %v330
    %v332 = vmul.f32 %v199, %v331
    %v333 = vadd.f32 %v330, %v332
    %334 = vst.msk [vmem:[#allocation2] sm:$0xff] %vm284, %v333
    // Predicated region
    $region46: #{tpu_custom_call.1} parent=1 // pred_check
      _
    $region47: #{tpu_custom_call.1} parent=1 // pred_check_branch
      %336 = sbr.rel (0) target = $region49
    $region48: #{tpu_custom_call.1} parent=1 // pred_region
      %s338 = ssub.s32 128, 128
      %339 = vsyncadd [#allocation3], %s338
      %s341 = sshll.u32 [#allocation2], 4
      %s342 = int_to_ptr.vmem [resolvable:$true] %s341
      %344 = dma.vmem_to_hbm [thread:$0]  %s342, 128, %s11, [#allocation3]
    $region49: #{tpu_custom_call.1} parent=1 // pred_fallthru
      _
    // Predicated region
    $region50: #{tpu_custom_call.1} parent=1 // pred_check
      _
    $region51: #{tpu_custom_call.1} parent=1 // pred_check_branch
      %346 = sbr.rel (0) target = $region53
    $region52: #{tpu_custom_call.1} parent=1 // pred_region
      %347 = dma.done [#allocation3], 128
    $region53: #{tpu_custom_call.1} parent=1 // pred_fallthru
      _
    %348 = vsyncpa [#allocation3], 1

</llo_original>
